<compile_context>
chip_gen: v7x
topology: tpu7x:2x2x1
jax: 0.10.0
libtpu: 0.0.40
codegen_flags: <defaults>
</compile_context>

<pallas_src>
import functools

import jax
import jax.numpy as jnp
from jax.experimental import pallas as pl
from jax.experimental.pallas import tpu as pltpu

EPS = 1e-5

# Target ~2 MiB per x block: big enough to hit ~85% of HBM roofline, small enough
# that double-buffered in+out stays well under v7x's 64 MiB VMEM.
_TARGET_BLOCK_BYTES = 2 << 20


def _pick_batch_block(B, T, C, itemsize, target_bytes=_TARGET_BLOCK_BYTES):
    """Largest divisor Bb of B such that the (Bb, T, C) block is <= target_bytes."""
    row_bytes = max(1, T * C * itemsize)
    max_rows = max(1, target_bytes // row_bytes)
    bb = 1
    for cand in range(1, B + 1):
        if B % cand == 0 and cand <= max_rows:
            bb = cand
    return bb


def _vmem_limit_bytes(block_bytes):
    # 2x for double buffering of all pipelined blocks + headroom for compiler scratch.
    need = 2 * block_bytes + (4 << 20)
    return int(min(max(need, 32 << 20), 48 << 20))


def _revin_norm_kernel(x_ref, w_ref, b_ref, y_ref, mean_ref, std_ref, *, eps, affine):
    # x_ref: (Bb, T, C); w_ref/b_ref: (1, 1, C)
    x = x_ref[...].astype(jnp.float32)
    mean = jnp.mean(x, axis=1, keepdims=True)                      # (Bb, 1, C)
    centered = x - mean
    var = jnp.mean(centered * centered, axis=1, keepdims=True)     # unbiased=False
    std = jnp.sqrt(var + eps)                                      # (Bb, 1, C)

    # Fused scale/shift: divides only on the (Bb, 1, C) tile, one mul+add per element.
    inv_std = 1.0 / std
    if affine:
        scale = w_ref[...] * inv_std                               # (Bb, 1, C)
        shift = b_ref[...] - mean * scale
    else:
        scale = inv_std
        shift = -mean * inv_std

    y_ref[...] = (x * scale + shift).astype(y_ref.dtype)
    mean_ref[...] = mean.astype(mean_ref.dtype)
    std_ref[...] = std.astype(std_ref.dtype)


def _revin_denorm_kernel(x_ref, w_ref, b_ref, mean_ref, std_ref, y_ref, *, eps, affine):
    x = x_ref[...].astype(jnp.float32)
    std = std_ref[...].astype(jnp.float32)                         # (Bb, 1, C)
    mean = mean_ref[...].astype(jnp.float32)                       # (Bb, 1, C)

    if affine:
        # (x - b) / (w + eps^2) * std + mean  ==  x * scale + shift
        scale = std / (w_ref[...] + eps * eps)
        shift = mean - b_ref[...] * scale
    else:
        scale = std
        shift = mean

    y_ref[...] = (x * scale + shift).astype(y_ref.dtype)


def revin_norm(x, weight, bias, *, eps=EPS, affine=True):
    """x: (B, T, C); weight/bias: (C,). Returns (y, mean, stdev)."""
    B, T, C = x.shape
    w = weight.reshape(1, 1, C).astype(jnp.float32)
    b = bias.reshape(1, 1, C).astype(jnp.float32)

    itemsize = jnp.dtype(x.dtype).itemsize
    Bb = _pick_batch_block(B, T, C, itemsize)
    grid = (B // Bb,)

    # Bytes of all pipelined blocks per grid step (x in + y/mean/std out + w/b).
    block_bytes = (
        Bb * T * C * itemsize            # x block
        + Bb * T * C * itemsize          # y block
        + 2 * Bb * C * 4                 # mean, std blocks
        + 2 * C * 4                      # w, b
    )

    kernel = functools.partial(_revin_norm_kernel, eps=eps, affine=affine)
    y, mean, std = pl.pallas_call(
        kernel,
        out_shape=(
            jax.ShapeDtypeStruct((B, T, C), x.dtype),
            jax.ShapeDtypeStruct((B, 1, C), jnp.float32),
            jax.ShapeDtypeStruct((B, 1, C), jnp.float32),
        ),
        grid_spec=pltpu.PrefetchScalarGridSpec(
            num_scalar_prefetch=0,
            grid=grid,
            in_specs=[
                pl.BlockSpec((Bb, T, C), lambda i: (i, 0, 0)),
                pl.BlockSpec((1, 1, C), lambda i: (0, 0, 0)),
                pl.BlockSpec((1, 1, C), lambda i: (0, 0, 0)),
            ],
            out_specs=[
                pl.BlockSpec((Bb, T, C), lambda i: (i, 0, 0)),
                pl.BlockSpec((Bb, 1, C), lambda i: (i, 0, 0)),
                pl.BlockSpec((Bb, 1, C), lambda i: (i, 0, 0)),
            ],
        ),
        compiler_params=pltpu.CompilerParams(
            dimension_semantics=("parallel",),
            vmem_limit_bytes=_vmem_limit_bytes(block_bytes),
        ),
    )(x, w, b)
    return y, mean, std


def revin_denorm(x, weight, bias, mean, std, *, eps=EPS, affine=True, donate_x=False):
    """x: (B, T, C); mean/std: (B, 1, C); weight/bias: (C,). Returns denormalized x.

    donate_x=True aliases x to the output (halves HBM footprint); only use it if
    the caller does not need x afterwards.
    """
    B, T, C = x.shape
    w = weight.reshape(1, 1, C).astype(jnp.float32)
    b = bias.reshape(1, 1, C).astype(jnp.float32)

    itemsize = jnp.dtype(x.dtype).itemsize
    Bb = _pick_batch_block(B, T, C, itemsize)
    grid = (B // Bb,)

    block_bytes = (
        2 * Bb * T * C * itemsize        # x block + y block
        + 2 * Bb * C * 4                 # mean, std blocks
        + 2 * C * 4                      # w, b
    )

    kernel = functools.partial(_revin_denorm_kernel, eps=eps, affine=affine)
    y = pl.pallas_call(
        kernel,
        out_shape=jax.ShapeDtypeStruct((B, T, C), x.dtype),
        grid_spec=pltpu.PrefetchScalarGridSpec(
            num_scalar_prefetch=0,
            grid=grid,
            in_specs=[
                pl.BlockSpec((Bb, T, C), lambda i: (i, 0, 0)),
                pl.BlockSpec((1, 1, C), lambda i: (0, 0, 0)),
                pl.BlockSpec((1, 1, C), lambda i: (0, 0, 0)),
                pl.BlockSpec((Bb, 1, C), lambda i: (i, 0, 0)),
                pl.BlockSpec((Bb, 1, C), lambda i: (i, 0, 0)),
            ],
            out_specs=pl.BlockSpec((Bb, T, C), lambda i: (i, 0, 0)),
        ),
        compiler_params=pltpu.CompilerParams(
            dimension_semantics=("parallel",),
            vmem_limit_bytes=_vmem_limit_bytes(block_bytes),
        ),
        input_output_aliases=({0: 0} if donate_x else {}),
    )(x, w, b, mean, std)
    return y


if __name__ == "__main__":
    # Small shapes consistent with the module: (batch, seq_len, num_features)
    B, T, C = 2, 8, 32
    key = jax.random.PRNGKey(0)
    x = jax.random.normal(key, (B, T, C), dtype=jnp.float32) * 3.0 + 1.5

    # Deterministic parameter init, as in RevIN._init_params: ones / zeros.
    affine_weight = jnp.ones((C,), dtype=jnp.float32)
    affine_bias = jnp.zeros((C,), dtype=jnp.float32)

    # mode='norm'
    y, mean, std = revin_norm(x, affine_weight, affine_bias, eps=EPS, affine=True)
    y = jax.block_until_ready(y)

    # mode='denorm' (round-trip with the saved statistics). donate_x left False
    # because y is still inspected below.
    x_rec = revin_denorm(y, affine_weight, affine_bias, mean, std, eps=EPS, affine=True)
    x_rec = jax.block_until_ready(x_rec)

    # Reference check in plain JAX (same semantics as the PyTorch module).
    ref_mean = jnp.mean(x, axis=1, keepdims=True)
    ref_std = jnp.sqrt(jnp.var(x, axis=1, keepdims=True, ddof=0) + EPS)
    ref_y = (x - ref_mean) / ref_std * affine_weight + affine_bias
    ref_rec = ((ref_y - affine_bias) / (affine_weight + EPS * EPS)) * ref_std + ref_mean

    assert jnp.allclose(y, ref_y, atol=1e-5, rtol=1e-5)
    assert jnp.allclose(mean, ref_mean, atol=1e-5, rtol=1e-5)
    assert jnp.allclose(std, ref_std, atol=1e-5, rtol=1e-5)
    assert jnp.allclose(x_rec, ref_rec, atol=1e-5, rtol=1e-5)
    assert jnp.allclose(x_rec, x, atol=1e-4, rtol=1e-4)

    # Also exercise the affine=False branch once (no reference params involved).
    y0, mean0, std0 = revin_norm(x, affine_weight, affine_bias, eps=EPS, affine=False)
    y0 = jax.block_until_ready(y0)
    assert jnp.allclose(y0, (x - ref_mean) / ref_std, atol=1e-5, rtol=1e-5)

    print("KERNEL_OK")
</pallas_src>

<mosaic_0001>
module attributes {stable_mosaic.version = 11 : i64} {
  func.func @_revin_norm_kernel(%arg0: i32, %arg1: memref<2x8x32xf32, #tpu.memory_space<vmem>>, %arg2: memref<1x1x32xf32, #tpu.memory_space<vmem>>, %arg3: memref<1x1x32xf32, #tpu.memory_space<vmem>>, %arg4: memref<2x8x32xf32, #tpu.memory_space<vmem>>, %arg5: memref<2x1x32xf32, #tpu.memory_space<vmem>>, %arg6: memref<2x1x32xf32, #tpu.memory_space<vmem>>) attributes {dimension_semantics = [#tpu.dimension_semantics<parallel>], iteration_bounds = array<i64: 1>, scalar_prefetch = 0 : i64, scratch_operands = 0 : i64, tpu.core_type = #tpu.core_type<tc>, window_params = [{transform_indices = @transform_0, window_bounds = array<i64: 2, 8, 32>}, {pipeline_mode = #tpu.pipeline_mode<synchronous>, transform_indices = @transform_1, window_bounds = array<i64: 1, 1, 32>}, {pipeline_mode = #tpu.pipeline_mode<synchronous>, transform_indices = @transform_2, window_bounds = array<i64: 1, 1, 32>}, {transform_indices = @transform_3, window_bounds = array<i64: 2, 8, 32>}, {transform_indices = @transform_4, window_bounds = array<i64: 2, 1, 32>}, {transform_indices = @transform_5, window_bounds = array<i64: 2, 1, 32>}]} {
    %c0 = arith.constant 0 : index
    %c0_0 = arith.constant 0 : index
    %c0_1 = arith.constant 0 : index
    %0 = vector.load %arg1[%c0, %c0_0, %c0_1] : memref<2x8x32xf32, #tpu.memory_space<vmem>>, vector<2x8x32xf32>
    %cst = arith.constant dense<0.000000e+00> : vector<2x32xf32>
    %1 = vector.multi_reduction <add>, %0, %cst [1] : vector<2x8x32xf32> to vector<2x32xf32>
    %2 = vector.shape_cast %1 : vector<2x32xf32> to vector<2x1x32xf32>
    %cst_2 = arith.constant 8.000000e+00 : f32
    %3 = vector.broadcast %cst_2 : f32 to vector<2x1x32xf32>
    %4 = arith.divf %2, %3 : vector<2x1x32xf32>
    %5 = vector.broadcast %4 : vector<2x1x32xf32> to vector<2x8x32xf32>
    %6 = arith.subf %0, %5 : vector<2x8x32xf32>
    %7 = arith.mulf %6, %6 : vector<2x8x32xf32>
    %cst_3 = arith.constant dense<0.000000e+00> : vector<2x32xf32>
    %8 = vector.multi_reduction <add>, %7, %cst_3 [1] : vector<2x8x32xf32> to vector<2x32xf32>
    %9 = vector.shape_cast %8 : vector<2x32xf32> to vector<2x1x32xf32>
    %cst_4 = arith.constant 8.000000e+00 : f32
    %10 = vector.broadcast %cst_4 : f32 to vector<2x1x32xf32>
    %11 = arith.divf %9, %10 : vector<2x1x32xf32>
    %cst_5 = arith.constant 9.99999974E-6 : f32
    %12 = vector.broadcast %cst_5 : f32 to vector<2x1x32xf32>
    %13 = arith.addf %11, %12 : vector<2x1x32xf32>
    %14 = math.sqrt %13 : vector<2x1x32xf32>
    %cst_6 = arith.constant 1.000000e+00 : f32
    %15 = vector.broadcast %cst_6 : f32 to vector<2x1x32xf32>
    %16 = arith.divf %15, %14 : vector<2x1x32xf32>
    %c0_7 = arith.constant 0 : index
    %c0_8 = arith.constant 0 : index
    %c0_9 = arith.constant 0 : index
    %17 = vector.load %arg2[%c0_7, %c0_8, %c0_9] : memref<1x1x32xf32, #tpu.memory_space<vmem>>, vector<1x1x32xf32>
    %18 = vector.broadcast %17 : vector<1x1x32xf32> to vector<2x1x32xf32>
    %19 = arith.mulf %18, %16 : vector<2x1x32xf32>
    %c0_10 = arith.constant 0 : index
    %c0_11 = arith.constant 0 : index
    %c0_12 = arith.constant 0 : index
    %20 = vector.load %arg3[%c0_10, %c0_11, %c0_12] : memref<1x1x32xf32, #tpu.memory_space<vmem>>, vector<1x1x32xf32>
    %21 = arith.mulf %4, %19 : vector<2x1x32xf32>
    %22 = vector.broadcast %20 : vector<1x1x32xf32> to vector<2x1x32xf32>
    %23 = arith.subf %22, %21 : vector<2x1x32xf32>
    %24 = vector.broadcast %19 : vector<2x1x32xf32> to vector<2x8x32xf32>
    %25 = arith.mulf %0, %24 : vector<2x8x32xf32>
    %26 = vector.broadcast %23 : vector<2x1x32xf32> to vector<2x8x32xf32>
    %27 = arith.addf %25, %26 : vector<2x8x32xf32>
    %c0_13 = arith.constant 0 : index
    %c0_14 = arith.constant 0 : index
    %c0_15 = arith.constant 0 : index
    %28 = vector.load %arg4[%c0_13, %c0_14, %c0_15] : memref<2x8x32xf32, #tpu.memory_space<vmem>>, vector<2x8x32xf32>
    tpu.vector_store %arg4[%c0_13, %c0_14, %c0_15], %27 {strides = array<i32>} : memref<2x8x32xf32, #tpu.memory_space<vmem>>, vector<2x8x32xf32>,
    %c0_16 = arith.constant 0 : index
    %c0_17 = arith.constant 0 : index
    %c0_18 = arith.constant 0 : index
    %29 = vector.load %arg5[%c0_16, %c0_17, %c0_18] : memref<2x1x32xf32, #tpu.memory_space<vmem>>, vector<2x1x32xf32>
    tpu.vector_store %arg5[%c0_16, %c0_17, %c0_18], %4 {strides = array<i32>} : memref<2x1x32xf32, #tpu.memory_space<vmem>>, vector<2x1x32xf32>,
    %c0_19 = arith.constant 0 : index
    %c0_20 = arith.constant 0 : index
    %c0_21 = arith.constant 0 : index
    %30 = vector.load %arg6[%c0_19, %c0_20, %c0_21] : memref<2x1x32xf32, #tpu.memory_space<vmem>>, vector<2x1x32xf32>
    tpu.vector_store %arg6[%c0_19, %c0_20, %c0_21], %14 {strides = array<i32>} : memref<2x1x32xf32, #tpu.memory_space<vmem>>, vector<2x1x32xf32>,
    return
  }
  func.func @transform_0(%arg0: i32) -> (i32, i32, i32) {
    %c0_i32 = arith.constant 0 : i32
    %c0_i32_0 = arith.constant 0 : i32
    %c0_i32_1 = arith.constant 0 : i32
    return %arg0, %c0_i32, %c0_i32_0 : i32, i32, i32
  }
  func.func @transform_1(%arg0: i32) -> (i32, i32, i32) {
    %c0_i32 = arith.constant 0 : i32
    %c0_i32_0 = arith.constant 0 : i32
    %c0_i32_1 = arith.constant 0 : i32
    %c0_i32_2 = arith.constant 0 : i32
    return %c0_i32, %c0_i32_0, %c0_i32_1 : i32, i32, i32
  }
  func.func @transform_2(%arg0: i32) -> (i32, i32, i32) {
    %c0_i32 = arith.constant 0 : i32
    %c0_i32_0 = arith.constant 0 : i32
    %c0_i32_1 = arith.constant 0 : i32
    %c0_i32_2 = arith.constant 0 : i32
    return %c0_i32, %c0_i32_0, %c0_i32_1 : i32, i32, i32
  }
  func.func @transform_3(%arg0: i32) -> (i32, i32, i32) {
    %c0_i32 = arith.constant 0 : i32
    %c0_i32_0 = arith.constant 0 : i32
    %c0_i32_1 = arith.constant 0 : i32
    return %arg0, %c0_i32, %c0_i32_0 : i32, i32, i32
  }
  func.func @transform_4(%arg0: i32) -> (i32, i32, i32) {
    %c0_i32 = arith.constant 0 : i32
    %c0_i32_0 = arith.constant 0 : i32
    %c0_i32_1 = arith.constant 0 : i32
    return %arg0, %c0_i32, %c0_i32_0 : i32, i32, i32
  }
  func.func @transform_5(%arg0: i32) -> (i32, i32, i32) {
    %c0_i32 = arith.constant 0 : i32
    %c0_i32_0 = arith.constant 0 : i32
    %c0_i32_1 = arith.constant 0 : i32
    return %arg0, %c0_i32, %c0_i32_0 : i32, i32, i32
  }
}

</mosaic_0001>

<llo_original>
// kernel: tpu_custom_call.1
$region0: #{tpu_custom_call.1}
  #allocation0 [shape = 'u32[]', space=smem, size = 0x4, offset = 0x4, fixed_abs, tag = 'smem constant byte address 0x4 - core index']
  #allocation1 [shape = 'u32[144,128]{1,0:T(1,128)}', space=vmem, size = 0x12000, scoped, tag = 'internal scratch']
  %s0 = inlined_call_operand.hbm [shape: f32[2,8,32], index: 0, kind: input, shape index: {}]
  %s1 = inlined_call_operand.vmem [shape: f32[1,1,32], index: 1, kind: input, shape index: {}]
  %s2 = inlined_call_operand.vmem [shape: f32[1,1,32], index: 2, kind: input, shape index: {}]
  %s3 = inlined_call_operand.hbm [shape: f32[2,8,32], index: 3, kind: output, shape index: {0}]
  %s4 = inlined_call_operand.hbm [shape: f32[2,1,32], index: 4, kind: output, shape index: {1}]
  %s5 = inlined_call_operand.hbm [shape: f32[2,1,32], index: 5, kind: output, shape index: {2}]
  %6 = xla_tuple %s3, %s4, %s5
  %s7 = sld [smem:[#allocation0]]
  $region42: #{tpu_custom_call.1} parent=0
    _
  %s9 = ssub.s32 1, %s7
  %s10 = scalar_select 0, %s9, %s7
  $region1: #{tpu_custom_call.1} parent=0
    #allocation2 [shape = 'u8[8192]{0}', space=vmem, size = 0x2000, scoped, tag = 'input window, operand 0, single buffered']
    #allocation3 [shape = 's32[1]{0}', space=sflag, size = 0x4, scoped, tag = 'scoped memory for tpu_custom_call.1']
    #allocation4 [shape = 's32[1]{0}', space=sflag, size = 0x4, scoped, tag = 'scoped memory for tpu_custom_call.1']
    #allocation5 [shape = 'u8[8192]{0}', space=vmem, size = 0x2000, scoped, tag = 'output window, operand 0, single buffered']
    #allocation6 [shape = 'u8[1024]{0}', space=vmem, size = 0x400, scoped, tag = 'output window, operand 1, single buffered']
    #allocation7 [shape = 's32[1]{0}', space=sflag, size = 0x4, scoped, tag = 'scoped memory for tpu_custom_call.1']
    #allocation8 [shape = 'u8[1024]{0}', space=vmem, size = 0x400, scoped, tag = 'output window, operand 2, single buffered']
    %11 = vsyncpa [#allocation3], 0
    %12 = vsyncpa [#allocation4], 0
    %13 = vsyncpa [#allocation7], 0
    // Predicated region
    $region2: #{tpu_custom_call.1} parent=1 // pred_check
      _
    $region3: #{tpu_custom_call.1} parent=1 // pred_check_branch
      %15 = sbr.rel (0) target = $region5
    $region4: #{tpu_custom_call.1} parent=1 // pred_region
      %s17 = ssub.s32 256, 256
      %18 = vsyncadd [#allocation3], %s17
      %s19 = sshll.u32 [#allocation2], 4
      %s20 = int_to_ptr.vmem [resolvable:$true] %s19
      %25 = dma.hbm_to_vmem [thread:$0]  %s0, 256, %s20, [#allocation3], 128, 128, 8
    $region5: #{tpu_custom_call.1} parent=1 // pred_fallthru
      _
    // Predicated region
    $region6: #{tpu_custom_call.1} parent=1 // pred_check
      _
    $region7: #{tpu_custom_call.1} parent=1 // pred_check_branch
      %27 = sbr.rel (0) target = $region9
    $region8: #{tpu_custom_call.1} parent=1 // pred_region
      _
    $region9: #{tpu_custom_call.1} parent=1 // pred_fallthru
      _
    // Predicated region
    $region10: #{tpu_custom_call.1} parent=1 // pred_check
      _
    $region11: #{tpu_custom_call.1} parent=1 // pred_check_branch
      %29 = sbr.rel (0) target = $region13
    $region12: #{tpu_custom_call.1} parent=1 // pred_region
      _
    $region13: #{tpu_custom_call.1} parent=1 // pred_fallthru
      _
    // Predicated region
    $region14: #{tpu_custom_call.1} parent=1 // pred_check
      _
    $region15: #{tpu_custom_call.1} parent=1 // pred_check_branch
      %31 = sbr.rel (0) target = $region17
    $region16: #{tpu_custom_call.1} parent=1 // pred_region
      %32 = dma.done [#allocation3], 256
    $region17: #{tpu_custom_call.1} parent=1 // pred_fallthru
      _
    %v33 = vld [vmem:[#allocation2] sm:$0xff]
    %v34 = vld [vmem:[#allocation2 + $0x8] sm:$0xff]
    %vm35 = vcmask 261120
    %v36 = vsel %vm35, %v33, 0.0
    %v37 = vrot.slane %v36, 4
    %v38 = vadd.f32 %v36, %v37
    %v39 = vrot.slane %v38, 2
    %v40 = vadd.f32 %v38, %v39
    %v41 = vrot.slane %v40, 1
    %v42 = vadd.f32 %v40, %v41
    %v43 = vsel %vm35, %v34, 0.0
    %v44 = vrot.slane %v43, 4
    %v45 = vadd.f32 %v43, %v44
    %v46 = vrot.slane %v45, 2
    %v47 = vadd.f32 %v45, %v46
    %v48 = vrot.slane %v47, 1
    %v49 = vadd.f32 %v47, %v48
    %v50 = vrcp.pop 8.0
    %v51 = vmul.f32 %v42, %v50
    %v52 = vmul.f32 %v49, %v50
    %v53 = vsub.f32 %v33, %v51
    %v54 = vsub.f32 %v34, %v52
    %v55 = vmul.f32 %v53, %v53
    %v56 = vmul.f32 %v54, %v54
    %v57 = vsel %vm35, %v55, 0.0
    %v58 = vrot.slane %v57, 4
    %v59 = vadd.f32 %v57, %v58
    %v60 = vrot.slane %v59, 2
    %v61 = vadd.f32 %v59, %v60
    %v62 = vrot.slane %v61, 1
    %v63 = vadd.f32 %v61, %v62
    %v64 = vsel %vm35, %v56, 0.0
    %v65 = vrot.slane %v64, 4
    %v66 = vadd.f32 %v64, %v65
    %v67 = vrot.slane %v66, 2
    %v68 = vadd.f32 %v66, %v67
    %v69 = vrot.slane %v68, 1
    %v70 = vadd.f32 %v68, %v69
    %v71 = vmul.f32 %v63, %v50
    %v72 = vmul.f32 %v70, %v50
    %v73 = vadd.f32 %v71, 1e-05
    %v74 = vadd.f32 %v72, 1e-05
    %v75 = vrsqrt.pop %v73
    %v76 = vmul.f32 %v73, %v75
    %vm77 = vcmp.eq.f32.partialorder %v73, inf
    %v78 = vsel %vm77, %v73, %v76
    %vm79 = vcmp.eq.f32.partialorder %v73, 0.0
    %v80 = vand.u32 %v73, 2147483648
    %v81 = vsel %vm79, %v80, %v78
    %v82 = vrsqrt.pop %v74
    %v83 = vmul.f32 %v74, %v82
    %vm84 = vcmp.eq.f32.partialorder %v74, inf
    %v85 = vsel %vm84, %v74, %v83
    %vm86 = vcmp.eq.f32.partialorder %v74, 0.0
    %v87 = vand.u32 %v74, 2147483648
    %v88 = vsel %vm86, %v87, %v85
    %v89 = vrcp.pop %v81
    %v90 = vmul.f32 1.0, %v89
    %v91 = vrcp.pop %v88
    %v92 = vmul.f32 1.0, %v91
    %v93 = vld [vmem:[%s1] sm:$0x1]
    %v94 = vmul.f32 %v93, %v90
    %v95 = vmul.f32 %v93, %v92
    %v96 = vld [vmem:[%s2] sm:$0x1]
    %v97 = vmul.f32 %v51, %v94
    %v98 = vmul.f32 %v52, %v95
    %v99 = vsub.f32 %v96, %v97
    %v100 = vsub.f32 %v96, %v98
    %v103 = vlaneseq
    %v104 = vshrl.u32 %v103, 7
    %v105 = vsub.s32 0, %v104
    %v106 = vrot.slane %v94, %v105
    %v107 = vlaneseq
    %v108 = vshrl.u32 %v107, 7
    %v109 = vsub.s32 0, %v108
    %v110 = vrot.slane %v95, %v109
    %v113 = vmul.f32 %v33, %v106
    %v114 = vmul.f32 %v34, %v110
    %v117 = vlaneseq
    %v118 = vshrl.u32 %v117, 7
    %v119 = vsub.s32 0, %v118
    %v120 = vrot.slane %v99, %v119
    %v121 = vlaneseq
    %v122 = vshrl.u32 %v121, 7
    %v123 = vsub.s32 0, %v122
    %v124 = vrot.slane %v100, %v123
    %v127 = vadd.f32 %v113, %v120
    %v128 = vadd.f32 %v114, %v124
    %129 = vst.msk [vmem:[#allocation5] sm:$0xff] %vm35, %v127
    %130 = vst.msk [vmem:[#allocation5 + $0x8] sm:$0xff] %vm35, %v128
    %vm131 = vcmask 253952
    %132 = vst.msk [vmem:[#allocation6] sm:$0x1] %vm131, %v51
    %133 = vst.msk [vmem:[#allocation6 + $0x1] sm:$0x1] %vm131, %v52
    %134 = vst.msk [vmem:[#allocation8] sm:$0x1] %vm131, %v81
    %135 = vst.msk [vmem:[#allocation8 + $0x1] sm:$0x1] %vm131, %v88
    // Predicated region
    $region18: #{tpu_custom_call.1} parent=1 // pred_check
      _
    $region19: #{tpu_custom_call.1} parent=1 // pred_check_branch
      %137 = sbr.rel (0) target = $region21
    $region20: #{tpu_custom_call.1} parent=1 // pred_region
      %s139 = ssub.s32 256, 256
      %140 = vsyncadd [#allocation4], %s139
      %s141 = sshll.u32 [#allocation5], 4
      %s142 = int_to_ptr.vmem [resolvable:$true] %s141
      %147 = dma.vmem_to_hbm [thread:$0]  %s142, 256, %s3, [#allocation4], 128, 128, 8
    $region21: #{tpu_custom_call.1} parent=1 // pred_fallthru
      _
    // Predicated region
    $region22: #{tpu_custom_call.1} parent=1 // pred_check
      _
    $region23: #{tpu_custom_call.1} parent=1 // pred_check_branch
      %149 = sbr.rel (0) target = $region25
    $region24: #{tpu_custom_call.1} parent=1 // pred_region
      %s151 = ssub.s32 32, 32
      %152 = vsyncadd [#allocation7], %s151
      %s153 = sshll.u32 [#allocation6], 4
      %s154 = int_to_ptr.vmem [resolvable:$true] %s153
      %159 = dma.vmem_to_hbm [thread:$0]  %s154, 32, %s4, [#allocation7], 16, 16, 1
    $region25: #{tpu_custom_call.1} parent=1 // pred_fallthru
      _
    // Predicated region
    $region26: #{tpu_custom_call.1} parent=1 // pred_check
      _
    $region27: #{tpu_custom_call.1} parent=1 // pred_check_branch
      %161 = sbr.rel (0) target = $region29
    $region28: #{tpu_custom_call.1} parent=1 // pred_region
      %s163 = ssub.s32 32, 32
      %164 = vsyncadd [#allocation7], %s163
      %s165 = sshll.u32 [#allocation8], 4
      %s166 = int_to_ptr.vmem [resolvable:$true] %s165
      %171 = dma.vmem_to_hbm [thread:$0]  %s166, 32, %s5, [#allocation7], 16, 16, 1
    $region29: #{tpu_custom_call.1} parent=1 // pred_fallthru
      _
    // Predicated region
    $region30: #{tpu_custom_call.1} parent=1 // pred_check
      _
    $region31: #{tpu_custom_call.1} parent=1 // pred_check_branch
      %173 = sbr.rel (0) target = $region33
    $region32: #{tpu_custom_call.1} parent=1 // pred_region
      %174 = dma.done [#allocation4], 256
    $region33: #{tpu_custom_call.1} parent=1 // pred_fallthru
      _
    // Predicated region
    $region34: #{tpu_custom_call.1} parent=1 // pred_check
      _
    $region35: #{tpu_custom_call.1} parent=1 // pred_check_branch
      %176 = sbr.rel (0) target = $region37
    $region36: #{tpu_custom_call.1} parent=1 // pred_region
      %177 = dma.done [#allocation7], 32
    $region37: #{tpu_custom_call.1} parent=1 // pred_fallthru
      _
    // Predicated region
    $region38: #{tpu_custom_call.1} parent=1 // pred_check
      _
    $region39: #{tpu_custom_call.1} parent=1 // pred_check_branch
      %179 = sbr.rel (0) target = $region41
    $region40: #{tpu_custom_call.1} parent=1 // pred_region
      %180 = dma.done [#allocation7], 32
    $region41: #{tpu_custom_call.1} parent=1 // pred_fallthru
      _
    %181 = vsyncpa [#allocation3], 1
    %182 = vsyncpa [#allocation4], 1
    %183 = vsyncpa [#allocation7], 1

</llo_original>
